<compile_context>
chip_gen: v7x
topology: tpu7x:2x2x1
jax: 0.10.0
libtpu: 0.0.40
codegen_flags: <defaults>
</compile_context>

<pallas_src>
import functools

import jax
import jax.numpy as jnp
from jax.experimental import pallas as pl
from jax.experimental.pallas import tpu as pltpu


def _round_up(x: int, m: int) -> int:
    return (x + m - 1) // m * m


def _logistic_kernel(x_ref, wt_ref, b_ref, o_ref, *, apply_sigmoid: bool):
    # x_ref: [TB, D] (VMEM), wt_ref: [D, 1] (VMEM, resident), b_ref: [1, 1] (SMEM)
    x = x_ref[...]                       # [TB, D]
    wt = wt_ref[...]                     # [D, 1]
    # MXU matvec with f32 accumulation (reduction off the XLU/VPU path).
    h = jnp.dot(x, wt, preferred_element_type=jnp.float32)   # [TB, 1]
    h = h + b_ref[0, 0]                  # scalar bias from SMEM (VALU)
    if apply_sigmoid:
        h = jax.nn.sigmoid(h)            # EUP
    o_ref[...] = h.astype(o_ref.dtype)


def logistic_classifier_forward(x, weight, bias, *, sigmoid: bool = False,
                                vmem_data_budget_bytes: int = 24 * 1024 * 1024):
    """Forward pass of LogisticClassifier.

    x:      [batch, input_dim]  float32 (or bfloat16 for opt-in reduced HBM traffic)
    weight: [1, input_dim]      (PyTorch nn.Linear layout)
    bias:   [1]
    Returns [batch, 1]          float32
    """
    x = jnp.asarray(x)
    if x.dtype not in (jnp.float32, jnp.bfloat16):
        x = x.astype(jnp.float32)
    batch, input_dim = x.shape

    weight = jnp.asarray(weight).astype(x.dtype)
    assert weight.shape == (1, input_dim)
    w_t = weight.reshape(input_dim, 1)                       # [D, 1] for the MXU dot
    bias2d = jnp.asarray(bias, jnp.float32).reshape(1, 1)    # SMEM scalar

    itemsize = jnp.dtype(x.dtype).itemsize
    lanes_d = _round_up(input_dim, 128)                      # lane padding in VMEM

    # --- batch tile sized from the *VMEM* footprint (double-buffered) -------
    # x block row: lanes_d * itemsize bytes; out block row: 128 lanes * 4 bytes.
    per_row_vmem = 2 * lanes_d * itemsize + 2 * 128 * 4
    rows = max(8, (vmem_data_budget_bytes // per_row_vmem) // 8 * 8)

    padded8 = _round_up(batch, 8)
    tb = min(rows, padded8)
    # Guarantee >= 2 grid steps when possible so "parallel" can use both v7x TCs.
    if padded8 >= 16:
        tb = min(tb, _round_up(-(-padded8 // 2), 8))
    tb = max(8, tb // 8 * 8)

    # Pad batch to a multiple of the tile so every block is full (no masked DMA).
    padded_batch = _round_up(batch, tb)
    if padded_batch != batch:
        x = jnp.pad(x, ((0, padded_batch - batch), (0, 0)))
    grid = (padded_batch // tb,)

    # VMEM limit from the actual footprint (+ resident weight + headroom).
    weight_vmem = 2 * 8 * lanes_d * max(itemsize, 4)
    vmem_limit = int(tb * per_row_vmem + weight_vmem + 4 * 1024 * 1024)
    vmem_limit = min(vmem_limit, 96 * 1024 * 1024)

    cost = pl.CostEstimate(
        flops=2 * padded_batch * input_dim,
        transcendentals=padded_batch if sigmoid else 0,
        bytes_accessed=(padded_batch * input_dim * itemsize     # x
                        + input_dim * itemsize                   # weight
                        + 4                                      # bias
                        + padded_batch * 4),                     # out
    )

    kernel = functools.partial(_logistic_kernel, apply_sigmoid=sigmoid)
    out = pl.pallas_call(
        kernel,
        out_shape=jax.ShapeDtypeStruct((padded_batch, 1), jnp.float32),
        grid_spec=pltpu.PrefetchScalarGridSpec(
            num_scalar_prefetch=0,
            grid=grid,
            in_specs=[
                # x: streamed & double-buffered over the batch axis.
                pl.BlockSpec((tb, input_dim), lambda i: (i, 0)),
                # weight^T: tiny, constant block index -> stays resident in VMEM.
                pl.BlockSpec((input_dim, 1), lambda i: (0, 0)),
                # bias: untiled scalar in SMEM (no per-step VMEM DMA).
                pl.BlockSpec(memory_space=pltpu.MemorySpace.SMEM),
            ],
            out_specs=pl.BlockSpec((tb, 1), lambda i: (i, 0)),
        ),
        compiler_params=pltpu.CompilerParams(
            dimension_semantics=("parallel",),    # megacore sharding on v7x
            vmem_limit_bytes=vmem_limit,
        ),
        cost_estimate=cost,
    )(x, w_t, bias2d)

    return out[:batch]


def init_params(key, input_dim):
    # Mimic PyTorch nn.Linear default init: U(-1/sqrt(in), 1/sqrt(in)).
    kw, kb = jax.random.split(key)
    bound = 1.0 / jnp.sqrt(jnp.float32(input_dim))
    weight = jax.random.uniform(kw, (1, input_dim), jnp.float32, -bound, bound)
    bias = jax.random.uniform(kb, (1,), jnp.float32, -bound, bound)
    return weight, bias


if __name__ == "__main__":
    key = jax.random.PRNGKey(0)
    kx, kp = jax.random.split(key)

    # Small deterministic shapes; batch deliberately not a multiple of 8 to
    # exercise the padding path (and >= 16 rows to exercise the 2-step grid).
    batch, input_dim = 10, 32
    x = jax.random.normal(kx, (batch, input_dim), jnp.float32)
    weight, bias = init_params(kp, input_dim)

    # forward(x, sigmoid=False) and forward(x, sigmoid=True)
    logits = logistic_classifier_forward(x, weight, bias, sigmoid=False)
    probs = logistic_classifier_forward(x, weight, bias, sigmoid=True)
    jax.block_until_ready(logits)
    jax.block_until_ready(probs)

    # Reference check in plain JAX.
    ref_logits = x @ weight.T + bias.reshape(1, 1)
    ref_probs = jax.nn.sigmoid(ref_logits)
    assert logits.shape == (batch, 1)
    assert probs.shape == (batch, 1)
    assert jnp.allclose(logits, ref_logits, atol=1e-4), float(
        jnp.max(jnp.abs(logits - ref_logits)))
    assert jnp.allclose(probs, ref_probs, atol=1e-4), float(
        jnp.max(jnp.abs(probs - ref_probs)))

    print("KERNEL_OK")
</pallas_src>

<mosaic_0001>
module attributes {stable_mosaic.version = 11 : i64} {
  func.func @_logistic_kernel(%arg0: i32, %arg1: memref<8x32xf32, #tpu.memory_space<vmem>>, %arg2: memref<32x1xf32, #tpu.memory_space<vmem>>, %arg3: memref<1x1xf32, #tpu.memory_space<smem>>, %arg4: memref<8x1xf32, #tpu.memory_space<vmem>>) attributes {dimension_semantics = [#tpu.dimension_semantics<parallel>], iteration_bounds = array<i64: 2>, scalar_prefetch = 0 : i64, scratch_operands = 0 : i64, tpu.core_type = #tpu.core_type<tc>, window_params = [{transform_indices = @transform_0, window_bounds = array<i64: 8, 32>}, {pipeline_mode = #tpu.pipeline_mode<synchronous>, transform_indices = @transform_1, window_bounds = array<i64: 32, 1>}, {transform_indices = @transform_2, window_bounds = array<i64: 1, 1>}, {transform_indices = @transform_3, window_bounds = array<i64: 8, 1>}]} {
    %c0 = arith.constant 0 : index
    %c0_0 = arith.constant 0 : index
    %0 = vector.load %arg1[%c0, %c0_0] : memref<8x32xf32, #tpu.memory_space<vmem>>, vector<8x32xf32>
    %c0_1 = arith.constant 0 : index
    %c0_2 = arith.constant 0 : index
    %1 = vector.load %arg2[%c0_1, %c0_2] : memref<32x1xf32, #tpu.memory_space<vmem>>, vector<32x1xf32>
    %cst = arith.constant dense<0.000000e+00> : vector<8x1xf32>
    %2 = tpu.matmul %0, %1, %cst {dimension_numbers = #tpu.dot_dimension_numbers<[1], [0], [0], [1], [0, 0, 1, 1], [], []>} : vector<8x32xf32>, vector<32x1xf32>, vector<8x1xf32> -> vector<8x1xf32>
    %c0_3 = arith.constant 0 : index
    %c0_4 = arith.constant 0 : index
    %3 = memref.load %arg3[%c0_3, %c0_4] : memref<1x1xf32, #tpu.memory_space<smem>>
    %4 = vector.broadcast %3 : f32 to vector<8x1xf32>
    %5 = arith.addf %2, %4 : vector<8x1xf32>
    %c0_5 = arith.constant 0 : index
    %c0_6 = arith.constant 0 : index
    %6 = vector.load %arg4[%c0_5, %c0_6] : memref<8x1xf32, #tpu.memory_space<vmem>>, vector<8x1xf32>
    tpu.vector_store %arg4[%c0_5, %c0_6], %5 {strides = array<i32>} : memref<8x1xf32, #tpu.memory_space<vmem>>, vector<8x1xf32>,
    return
  }
  func.func @transform_0(%arg0: i32) -> (i32, i32) {
    %c0_i32 = arith.constant 0 : i32
    %c0_i32_0 = arith.constant 0 : i32
    return %arg0, %c0_i32 : i32, i32
  }
  func.func @transform_1(%arg0: i32) -> (i32, i32) {
    %c0_i32 = arith.constant 0 : i32
    %c0_i32_0 = arith.constant 0 : i32
    %c0_i32_1 = arith.constant 0 : i32
    return %c0_i32, %c0_i32_0 : i32, i32
  }
  func.func @transform_2(%arg0: i32) -> (i32, i32) {
    %c0_i32 = arith.constant 0 : i32
    %c0_i32_0 = arith.constant 0 : i32
    %c0_i32_1 = arith.constant 0 : i32
    return %c0_i32, %c0_i32_0 : i32, i32
  }
  func.func @transform_3(%arg0: i32) -> (i32, i32) {
    %c0_i32 = arith.constant 0 : i32
    %c0_i32_0 = arith.constant 0 : i32
    return %arg0, %c0_i32 : i32, i32
  }
}

</mosaic_0001>

<llo_original>
// kernel: tpu_custom_call.1
$region0: #{tpu_custom_call.1}
  #allocation0 [shape = 'u32[]', space=smem, size = 0x4, offset = 0x4, fixed_abs, tag = 'smem constant byte address 0x4 - core index']
  #allocation1 [shape = 'u32[144,128]{1,0:T(1,128)}', space=vmem, size = 0x12000, scoped, tag = 'internal scratch']
  #allocation2 [shape = 'f32[1,1]{1,0:T(1,128)S(6)}', space=smem, size = 0x200, scoped, tag = 'scoped memory for tpu_custom_call.1']
  %s0 = inlined_call_operand.vmem [shape: f32[16,32], index: 0, kind: input, shape index: {}]
  %s1 = inlined_call_operand.vmem [shape: f32[32,1], index: 1, kind: input, shape index: {}]
  %s2 = inlined_call_operand.<no memory space> [shape: f32[1,1], index: 2, kind: input, shape index: {}]
  %s3 = inlined_call_operand.vmem [shape: f32[16,1], index: 3, kind: output, shape index: {}]
  %s4 = sld [smem:[#allocation0]]
  $region45: #{tpu_custom_call.1} parent=0
    _
  %s6 = ssub.s32 1, %s4
  %s7 = scalar_select 0, %s6, %s4
  %8 = sst [smem:[#allocation2]] %s2
  loop: start=0, step=1, limit=4
  $region2: #{tpu_custom_call.1} parent=0 // loop_pre_header
    _
  $region3: #{tpu_custom_call.1} parent=0 // loop_header
    %s10 = sphi 0, %s14
    %p11 = scmp.ge.s32.totalorder %s10, 4
    %s20 = sphi 0, %s22
    %s23 = sphi 0, %s20
    %s24 = sphi 0, %s23
    %s40 = sphi 0, %s24
    %s44 = sphi 0, %s44
    %s46 = sphi 0, %s44
    %s47 = sphi 0, %s46
    %s61 = sphi 0, %s47
    %s65 = sphi 0, %s65
    %s67 = sphi 0, %s65
    %s68 = sphi 0, %s67
    %s82 = sphi 0, %s68
    %s88 = sphi 0, %s90
    %s91 = sphi 0, %s88
    %s92 = sphi 0, %s91
    %s108 = sphi 0, %s92
  $region4: #{tpu_custom_call.1} parent=0 // loop_header_branch
    %13 = sbr.rel (%p11) target = $region8
  $region5: #{tpu_custom_call.1} parent=0 // loop_body
    %s15 = ssub.s32 %s10, 1
    %s16 = ssub.s32 %s10, 2
    %s17 = sadd.s32 %s10, 1
    %s18 = ssub.s32 %s10, %s17
    %p19 = scmp.eq.s32.totalorder %s18, 0
    %s21 = sadd.s32 %s20, 1
    %s22 = scalar_select %p19, %s20, %s21
    %p25 = pneg %p19
    %p26 = scmp.eq.s32.totalorder %s10, 1
    %p27 = por %p25, %p26
    %p28 = scmp.ne.s32.totalorder %s20, %s23
    %p29 = scmp.eq.s32.totalorder %s10, 0
    %p30 = por %p28, %p29
    %p31 = scmp.ne.s32.totalorder %s20, %s23
    %p32 = scmp.eq.s32.totalorder %s15, 1
    %p33 = por %p31, %p32
    %p34 = scmp.ne.s32.totalorder %s23, %s24
    %p35 = scmp.eq.s32.totalorder %s15, 0
    %p36 = por %p34, %p35
    %p37 = scmp.ne.s32.totalorder %s23, %s24
    %p38 = scmp.eq.s32.totalorder %s16, 1
    %p39 = por %p37, %p38
    %p41 = scmp.ne.s32.totalorder %s24, %s40
    %p42 = scmp.eq.s32.totalorder %s16, 0
    %p43 = por %p41, %p42
    %s45 = sadd.s32 %s44, 1
    %p48 = scmp.eq.s32.totalorder %s10, 1
    %p49 = scmp.ne.s32.totalorder %s44, %s46
    %p50 = scmp.eq.s32.totalorder %s10, 0
    %p51 = por %p49, %p50
    %p52 = scmp.ne.s32.totalorder %s44, %s46
    %p53 = scmp.eq.s32.totalorder %s15, 1
    %p54 = por %p52, %p53
    %p55 = scmp.ne.s32.totalorder %s46, %s47
    %p56 = scmp.eq.s32.totalorder %s15, 0
    %p57 = por %p55, %p56
    %p58 = scmp.ne.s32.totalorder %s46, %s47
    %p59 = scmp.eq.s32.totalorder %s16, 1
    %p60 = por %p58, %p59
    %p62 = scmp.ne.s32.totalorder %s47, %s61
    %p63 = scmp.eq.s32.totalorder %s16, 0
    %p64 = por %p62, %p63
    %s66 = sadd.s32 %s65, 1
    %p69 = scmp.eq.s32.totalorder %s10, 1
    %p70 = scmp.ne.s32.totalorder %s65, %s67
    %p71 = scmp.eq.s32.totalorder %s10, 0
    %p72 = por %p70, %p71
    %p73 = scmp.ne.s32.totalorder %s65, %s67
    %p74 = scmp.eq.s32.totalorder %s15, 1
    %p75 = por %p73, %p74
    %p76 = scmp.ne.s32.totalorder %s67, %s68
    %p77 = scmp.eq.s32.totalorder %s15, 0
    %p78 = por %p76, %p77
    %p79 = scmp.ne.s32.totalorder %s67, %s68
    %p80 = scmp.eq.s32.totalorder %s16, 1
    %p81 = por %p79, %p80
    %p83 = scmp.ne.s32.totalorder %s68, %s82
    %p84 = scmp.eq.s32.totalorder %s16, 0
    %p85 = por %p83, %p84
    %s86 = ssub.s32 %s10, %s17
    %p87 = scmp.eq.s32.totalorder %s86, 0
    %s89 = sadd.s32 %s88, 1
    %s90 = scalar_select %p87, %s88, %s89
    %p93 = pneg %p87
    %p94 = scmp.eq.s32.totalorder %s10, 1
    %p95 = por %p93, %p94
    %p96 = scmp.ne.s32.totalorder %s88, %s91
    %p97 = scmp.eq.s32.totalorder %s10, 0
    %p98 = por %p96, %p97
    %p99 = scmp.ne.s32.totalorder %s88, %s91
    %p100 = scmp.eq.s32.totalorder %s15, 1
    %p101 = por %p99, %p100
    %p102 = scmp.ne.s32.totalorder %s91, %s92
    %p103 = scmp.eq.s32.totalorder %s15, 0
    %p104 = por %p102, %p103
    %p105 = scmp.ne.s32.totalorder %s91, %s92
    %p106 = scmp.eq.s32.totalorder %s16, 1
    %p107 = por %p105, %p106
    %p109 = scmp.ne.s32.totalorder %s92, %s108
    %p110 = scmp.eq.s32.totalorder %s16, 0
    %p111 = por %p109, %p110
    %p112 = scmp.le.s32.totalorder 1, %s10
    %p113 = scmp.lt.s32.totalorder %s10, 3
    %p114 = pnand %p112, %p113
    %p115 = pneg %p114
    // Predicated region
    $region9: #{tpu_custom_call.1} parent=5 // pred_check
      _
    $region10: #{tpu_custom_call.1} parent=5 // pred_check_branch
      %117 = sbr.rel (%p114) target = $region12
    $region11: #{tpu_custom_call.1} parent=5 // pred_region
      %s118 = ssub.s32 %s10, 1
      // Predicated region
      $region13: #{tpu_custom_call.1} parent=11 // pred_check
        %p119 = pneg %p57
      $region14: #{tpu_custom_call.1} parent=11 // pred_check_branch
        %121 = sbr.rel (%p119) target = $region16
      $region15: #{tpu_custom_call.1} parent=11 // pred_region
        _
      $region16: #{tpu_custom_call.1} parent=11 // pred_fallthru
        _
      // Predicated region
      $region17: #{tpu_custom_call.1} parent=11 // pred_check
        %p122 = pneg %p78
      $region18: #{tpu_custom_call.1} parent=11 // pred_check_branch
        %124 = sbr.rel (%p122) target = $region20
      $region19: #{tpu_custom_call.1} parent=11 // pred_region
        _
      $region20: #{tpu_custom_call.1} parent=11 // pred_fallthru
        _
    $region12: #{tpu_custom_call.1} parent=5 // pred_fallthru
      _
    %p125 = scmp.lt.s32.totalorder %s10, 2
    // Predicated region
    $region21: #{tpu_custom_call.1} parent=5 // pred_check
      %p126 = pneg %p125
    $region22: #{tpu_custom_call.1} parent=5 // pred_check_branch
      %128 = sbr.rel (%p126) target = $region24
    $region23: #{tpu_custom_call.1} parent=5 // pred_region
      // Predicated region
      $region25: #{tpu_custom_call.1} parent=23 // pred_check
        %p129 = pneg %p30
      $region26: #{tpu_custom_call.1} parent=23 // pred_check_branch
        %131 = sbr.rel (%p129) target = $region28
      $region27: #{tpu_custom_call.1} parent=23 // pred_region
        %p132 = scmp.lt.s32.totalorder %s10, 1
        %s133 = scalar_select %p132, %s10, 1
        %s134 = smul.addr %s133, 8
        %s135 = scalar_lea.vmem %s0, %s134
      $region28: #{tpu_custom_call.1} parent=23 // pred_fallthru
        _
    $region24: #{tpu_custom_call.1} parent=5 // pred_fallthru
      _
    %p136 = scmp.le.s32.totalorder 1, %s10
    %p137 = scmp.lt.s32.totalorder %s10, 3
    %p138 = pnand %p136, %p137
    %p139 = pneg %p138
    // Predicated region
    $region29: #{tpu_custom_call.1} parent=5 // pred_check
      _
    $region30: #{tpu_custom_call.1} parent=5 // pred_check_branch
      %141 = sbr.rel (%p138) target = $region32
    $region31: #{tpu_custom_call.1} parent=5 // pred_region
      %s142 = ssub.s32 %s10, 1
      %p143 = scmp.lt.s32.totalorder %s15, 1
      %s144 = scalar_select %p143, %s15, 1
      %s145 = smul.addr %s144, 8
      %s146 = scalar_lea.vmem %s0, %s145
      %p147 = pneg %p36
      %p148 = pneg %p33
      %p149 = pneg %p57
      %p150 = pneg %p54
      %p151 = pneg %p78
      %p152 = pneg %p75
      %p153 = pneg %p104
      %p154 = pneg %p101
      %p155 = scmp.lt.s32.totalorder %s15, 1
      %s156 = scalar_select %p155, %s15, 1
      %s157 = smul.addr %s156, 8
      %s158 = scalar_lea.vmem %s3, %s157
      %p159 = scmp.lt.s32.totalorder %s15, 1
      %s160 = scalar_select %p159, %s15, 1
      %s161 = smul.addr %s160, 8
      %s162 = scalar_lea.vmem %s0, %s161
      %p163 = scmp.lt.s32.totalorder %s15, 1
      %s164 = scalar_select %p163, %s15, 1
      %s165 = smul.addr %s164, 8
      %s166 = scalar_lea.vmem %s3, %s165
      %v167 = vld [vmem:[%s162] sm:$0xff]
      %v168 = vld [vmem:[%s1] sm:$0xff]
      %v169 = vld [vmem:[%s1 + $0x8] sm:$0xff]
      %v170 = vld [vmem:[%s1 + $0x10] sm:$0xff]
      %v171 = vld [vmem:[%s1 + $0x18] sm:$0xff]
      %s172 = sld [smem:[#allocation2]]
      %v173 = vstv %s172
      %vm174 = vcmask 261120
      %v176 = vsel %vm174, %v167, 0
      %178 = vmatprep.subr.mxu0 0.0
      %179 = vmatpush1.msra.mxu0 %v168
      %180 = vmatprep.subr.mxu0 0.0
      %181 = vmatpush1.msra.mxu0 %v169
      %182 = vmatprep.subr.mxu0 0.0
      %183 = vmatpush1.msra.mxu0 %v170
      %184 = vmatprep.subr.mxu0 0.0
      %185 = vmatpush1.msra.mxu0 %v171
      %186 = vmatprep.subr.mxu0 0.0
      %187 = vmatpush1.msra.mxu0 0.0
      %188 = vmatprep.subr.mxu0 0.0
      %189 = vmatpush1.msra.mxu0 0.0
      %190 = vmatprep.subr.mxu0 0.0
      %191 = vmatpush1.msra.mxu0 0.0
      %192 = vmatprep.subr.mxu0 0.0
      %193 = vmatpush1.msra.mxu0 0.0
      %194 = vmatprep.subr.mxu0 0.0
      %195 = vmatpush1.msra.mxu0 0.0
      %196 = vmatprep.subr.mxu0 0.0
      %197 = vmatpush1.msra.mxu0 0.0
      %198 = vmatprep.subr.mxu0 0.0
      %199 = vmatpush1.msra.mxu0 0.0
      %200 = vmatprep.subr.mxu0 0.0
      %201 = vmatpush1.msra.mxu0 0.0
      %202 = vmatprep.subr.mxu0 0.0
      %203 = vmatpush1.msra.mxu0 0.0
      %204 = vmatprep.subr.mxu0 0.0
      %205 = vmatpush1.msra.mxu0 0.0
      %206 = vmatprep.subr.mxu0 0.0
      %207 = vmatpush1.msra.mxu0 0.0
      %208 = vmatprep.subr.mxu0 0.0
      %209 = vmatpush1.msra.mxu0 0.0
      %210 = vmatprep.subr.mxu0 0.0
      %211 = vmatpush1.msra.mxu0 0.0
      %212 = vmatprep.subr.mxu0 0.0
      %213 = vmatpush1.msra.mxu0 0.0
      %214 = vmatprep.subr.mxu0 0.0
      %215 = vmatpush1.msra.mxu0 0.0
      %216 = vmatprep.subr.mxu0 0.0
      %217 = vmatpush1.msra.mxu0 0.0
      %218 = vmatprep.subr.mxu0 0.0
      %219 = vmatpush1.msra.mxu0 0.0
      %220 = vmatprep.subr.mxu0 0.0
      %221 = vmatpush1.msra.mxu0 0.0
      %222 = vmatprep.subr.mxu0 0.0
      %223 = vmatpush1.msra.mxu0 0.0
      %224 = vmatprep.subr.mxu0 0.0
      %225 = vmatpush1.msra.mxu0 0.0
      %226 = vmatprep.subr.mxu0 0.0
      %227 = vmatpush1.msra.mxu0 0.0
      %228 = vmatprep.subr.mxu0 0.0
      %229 = vmatpush1.msra.mxu0 0.0
      %230 = vmatprep.subr.mxu0 0.0
      %231 = vmatpush1.msra.mxu0 0.0
      %232 = vmatprep.subr.mxu0 0.0
      %233 = vmatpush1.msra.mxu0 0.0
      %234 = vmatprep.subr.mxu0 0.0
      %235 = vmatpush1.msra.mxu0 0.0
      %236 = vmatprep.subr.mxu0 0.0
      %237 = vmatpush1.msra.mxu0 0.0
      %238 = vmatprep.subr.mxu0 0.0
      %239 = vmatpush1.msra.mxu0 0.0
      %240 = vmatprep.subr.mxu0 0.0
      %241 = vmatpush1.msra.mxu0 0.0
      %242 = vmatprep.mubr.f32.mxu0 0.0
      %243 = vmatmul.mubr.f32.gmra.mrb[0].mxu0 %v176
      %v244 = vpop.f32.mrb[0].mxu0
      %v245 = vadd.f32 %v173, %v244
      %v246 = vpop.f32.mrb[0].mxu0
      %247 = vdwg.mxu0
      %vm248 = vcmask 7168
      %249 = vst.msk [vmem:[%s166] sm:$0xff] %vm248, %v245
      %p250 = scmp.lt.s32.totalorder %s15, 1
      %s251 = scalar_select %p250, %s15, 1
      %s252 = smul.addr %s251, 8
      %s253 = scalar_lea.vmem %s3, %s252
      // Predicated region
      $region33: #{tpu_custom_call.1} parent=31 // pred_check
        %p254 = pneg %p101
      $region34: #{tpu_custom_call.1} parent=31 // pred_check_branch
        %256 = sbr.rel (%p254) target = $region36
      $region35: #{tpu_custom_call.1} parent=31 // pred_region
        _
      $region36: #{tpu_custom_call.1} parent=31 // pred_fallthru
        _
    $region32: #{tpu_custom_call.1} parent=5 // pred_fallthru
      _
    %p257 = scmp.le.s32.totalorder 2, %s10
    // Predicated region
    $region37: #{tpu_custom_call.1} parent=5 // pred_check
      %p258 = pneg %p257
    $region38: #{tpu_custom_call.1} parent=5 // pred_check_branch
      %260 = sbr.rel (%p258) target = $region40
    $region39: #{tpu_custom_call.1} parent=5 // pred_region
      %s261 = ssub.s32 %s10, 2
      // Predicated region
      $region41: #{tpu_custom_call.1} parent=39 // pred_check
        %p262 = pneg %p107
      $region42: #{tpu_custom_call.1} parent=39 // pred_check_branch
        %264 = sbr.rel (%p262) target = $region44
      $region43: #{tpu_custom_call.1} parent=39 // pred_region
        %p265 = scmp.lt.s32.totalorder %s16, 1
        %s266 = scalar_select %p265, %s16, 1
        %s267 = smul.addr %s266, 8
        %s268 = scalar_lea.vmem %s3, %s267
      $region44: #{tpu_custom_call.1} parent=39 // pred_fallthru
        _
    $region40: #{tpu_custom_call.1} parent=5 // pred_fallthru
      _
  $region6: #{tpu_custom_call.1} parent=0 // loop_footer
    %s14 = sadd.s32 1, %s10
  $region7: #{tpu_custom_call.1} parent=0 // loop_footer_branch
    %9 = sbr.rel target = $region3
  $region8: #{tpu_custom_call.1} parent=0 // loop_exit
    _

</llo_original>
